<compile_context>
chip_gen: v7x
topology: tpu7x:2x2x1
jax: 0.10.0
libtpu: 0.0.40
codegen_flags: <defaults>
</compile_context>

<pallas_src>
import jax
import jax.numpy as jnp
from jax.experimental import pallas as pl
from jax.experimental.pallas import tpu as pltpu


def _round_up(v, m):
    return (v + m - 1) // m * m


# ------------------------------- glue (JAX) ----------------------------------
def normalize_adj(adj):
    """GCN symmetric normalization with self loops: D^-1/2 (A+I) D^-1/2."""
    n = adj.shape[0]
    a_tilde = adj + jnp.eye(n, dtype=adj.dtype)
    deg = jnp.sum(a_tilde, axis=1)
    d_inv_sqrt = jnp.where(deg > 0, 1.0 / jnp.sqrt(deg), 0.0)
    return a_tilde * d_inv_sqrt[:, None] * d_inv_sqrt[None, :]


def glorot(key, shape):
    fan_in, fan_out = shape
    limit = jnp.sqrt(6.0 / (fan_in + fan_out))
    return jax.random.uniform(key, shape, jnp.float32, -limit, limit)


def init_encoder_params(key, dim_in, dim_out, num_layers=2):
    """Mirrors Encoder.__init__: GCNConv(dim_in, 2*dim_out),
    (num_layers-2) x GCNConv(2*dim_out, 2*dim_out), GCNConv(2*dim_out, dim_out)."""
    assert num_layers >= 2
    dims = [dim_in] + [2 * dim_out] * (num_layers - 1) + [dim_out]
    params = []
    for layer in range(num_layers):
        key, wk = jax.random.split(key)
        w = glorot(wk, (dims[layer], dims[layer + 1]))
        b = jnp.zeros((dims[layer + 1],), jnp.float32)
        params.append((w, b))
    return params


# ----------------------------- Pallas kernel ---------------------------------
def encoder_kernel(a_ref, xw0_ref, w_ref, b_ref, o_ref,
                   h_ref, xw_ref, acc_ref, dma_sem):
    l = pl.program_id(0)           # layer index
    i = pl.program_id(1)           # row tile of A_hat
    k = pl.program_id(2)           # column (reduction) tile of A_hat
    nl = pl.num_programs(0)
    nk = pl.num_programs(2)
    tm, tk = a_ref.shape

    # Layer-0 prologue: XW_0 = X @ W_0 was precomputed (bf16) in the wrapper;
    # DMA it from HBM into the resident XW scratch exactly once.  No resident
    # X buffer, no VMEM->VMEM staging copy.
    @pl.when((l == 0) & (i == 0) & (k == 0))
    def _():
        cp = pltpu.make_async_copy(xw0_ref, xw_ref, dma_sem)
        cp.start()
        cp.wait()

    # Per-layer prologue (layers >= 1): XW_l = H_l @ W_l as a single bf16 MXU
    # matmul (f32 accumulate), kept resident so the inner sweep is one A-tile
    # matmul per grid step.
    @pl.when((l > 0) & (i == 0) & (k == 0))
    def _():
        xw_ref[...] = jnp.dot(
            h_ref[...], w_ref[0], preferred_element_type=jnp.float32
        ).astype(xw_ref.dtype)

    # f32 accumulator over the reduction (column) tiles of A_hat.
    @pl.when(k == 0)
    def _():
        acc_ref[...] = jnp.zeros_like(acc_ref)

    k0 = pl.multiple_of(k * tk, tk)
    acc_ref[...] += jnp.dot(
        a_ref[...], xw_ref[pl.ds(k0, tk), :], preferred_element_type=jnp.float32
    )

    # Epilogue (once per output tile): bias + ReLU, store next-layer
    # activations (bf16) into the resident H scratch.  Only the LAST layer
    # writes the lane-dense HBM output tile; intermediate layers must not.
    @pl.when(k == nk - 1)
    def _():
        h_new = jnp.maximum(acc_ref[...] + b_ref[0], 0.0)
        r0 = pl.multiple_of(i * tm, tm)
        h_ref[pl.ds(r0, tm), :] = h_new.astype(h_ref.dtype)

        @pl.when(l == nl - 1)
        def _():
            o_ref[...] = h_new.astype(o_ref.dtype)


def encoder_forward(x, adj, params):
    """Encoder.forward(x, Adj): num_layers fused GCN layers with ReLU."""
    n, f_in = x.shape
    num_layers = len(params)
    dims = [f_in] + [w.shape[1] for (w, _) in params]

    # Feature width only needs to cover hidden/output dims (layer 0's input
    # width is consumed by the XW_0 precompute below) -> no f_pad^2 blow-up
    # when dim_in >> hidden.
    f_pad = _round_up(max(dims[1:]), 128)

    # Row / reduction tiling of A_hat.  Lane-dense minimum of 128.  If the
    # double-buffered A block fits in ~16 MiB we use a single block whose
    # index is constant across all grid axes -> A_hat is DMA'd once and stays
    # resident across layers.  Otherwise stream 512-wide tiles (bump toward
    # 1024 on v6e/v7x if profiling shows step-overhead-bound sweeps).
    n_pad_small = _round_up(n, 128)
    if 2 * n_pad_small * n_pad_small * 2 <= 16 * 1024 * 1024:
        n_pad = n_pad_small
        tm = tk = n_pad
    else:
        tm = tk = 512
        n_pad = _round_up(n, tm)
    r_tiles = n_pad // tm
    k_tiles = n_pad // tk

    # --- plain-JAX glue: normalization, padding, layer-0 transform ----------
    a_hat = normalize_adj(adj)
    a_pad = jnp.zeros((n_pad, n_pad), jnp.bfloat16)
    a_pad = a_pad.at[:n, :n].set(a_hat.astype(jnp.bfloat16))

    # Layer-0 feature transform XW_0 = X @ W_0 precomputed here (f32 math,
    # bf16 handoff); the kernel DMAs it once into its XW scratch.
    w0, _ = params[0]
    xw0 = jnp.zeros((n_pad, f_pad), jnp.float32).at[:n, : w0.shape[1]].set(x @ w0)
    xw0 = xw0.astype(jnp.bfloat16)

    # Remaining layers' weights (bf16, used from layer 1 on) and all biases.
    w_stack = jnp.zeros((num_layers - 1, f_pad, f_pad), jnp.bfloat16)
    for layer in range(1, num_layers):
        w, _ = params[layer]
        fi, fo = w.shape
        w_stack = w_stack.at[layer - 1, :fi, :fo].set(w.astype(jnp.bfloat16))
    b_stack = jnp.zeros((num_layers, 1, f_pad), jnp.float32)
    for layer, (_, b) in enumerate(params):
        b_stack = b_stack.at[layer, 0, : b.shape[0]].set(b)

    # --- cost estimate & generation-aware VMEM budget ------------------------
    a_resident = (r_tiles == 1 and k_tiles == 1)
    a_bytes = n_pad * n_pad * 2 * (1 if a_resident else num_layers)
    bytes_accessed = (
        a_bytes
        + n_pad * f_pad * 2                     # XW_0
        + (num_layers - 1) * f_pad * f_pad * 2  # W stack
        + num_layers * f_pad * 4                # biases
        + n_pad * f_pad * 4                     # output (last layer only)
    )
    flops = (2 * (num_layers - 1) * n_pad * f_pad * f_pad
             + 2 * num_layers * n_pad * n_pad * f_pad)

    vmem_needed = (
        2 * n_pad * f_pad * 2        # H + XW scratch (bf16)
        + tm * f_pad * 4             # f32 accumulator
        + 2 * tm * tk * 2            # A tile, double-buffered
        + 2 * f_pad * f_pad * 2      # W block, double-buffered
        + 2 * f_pad * 4              # bias block
        + 2 * tm * f_pad * 4         # output tile, double-buffered
        + n_pad * f_pad * 4          # prologue dot f32 temporary (upper bound)
    )
    try:
        vmem_cap = pltpu.get_tpu_info().vmem_capacity_bytes
    except Exception:
        vmem_cap = 64 * 1024 * 1024  # v7x per-core floor; valid everywhere
    vmem_limit = min(max(int(vmem_needed * 1.5) + (8 << 20), 32 << 20),
                     int(vmem_cap * 0.9))

    out_pad = pl.pallas_call(
        encoder_kernel,
        out_shape=jax.ShapeDtypeStruct((n_pad, f_pad), jnp.float32),
        grid_spec=pltpu.PrefetchScalarGridSpec(
            num_scalar_prefetch=0,
            grid=(num_layers, r_tiles, k_tiles),
            in_specs=[
                pl.BlockSpec((tm, tk), lambda l, i, k: (i, k)),       # A_hat
                pl.BlockSpec(memory_space=pl.ANY),                    # XW_0 (HBM, manual DMA)
                pl.BlockSpec((1, f_pad, f_pad),                       # W_l (layers >= 1)
                             lambda l, i, k: (jnp.maximum(l - 1, 0), 0, 0)),
                pl.BlockSpec((1, 1, f_pad), lambda l, i, k: (l, 0, 0)),  # b_l
            ],
            out_specs=pl.BlockSpec((tm, f_pad), lambda l, i, k: (i, 0)),
            scratch_shapes=[
                pltpu.VMEM((n_pad, f_pad), jnp.bfloat16),   # H  (activations)
                pltpu.VMEM((n_pad, f_pad), jnp.bfloat16),   # XW (per layer)
                pltpu.VMEM((tm, f_pad), jnp.float32),       # accumulator
                pltpu.SemaphoreType.DMA(()),                # one-time XW_0 DMA
            ],
        ),
        compiler_params=pltpu.CompilerParams(
            # layer axis: sequential dependency; row axis: reads the full
            # previous-layer H from shared scratch, so it cannot be sharded
            # across cores; k axis: reduction.
            dimension_semantics=("arbitrary", "arbitrary", "arbitrary"),
            vmem_limit_bytes=vmem_limit,
        ),
        cost_estimate=pl.CostEstimate(
            flops=flops, transcendentals=0, bytes_accessed=bytes_accessed
        ),
    )(a_pad, xw0, w_stack, b_stack)

    return out_pad[:n, : dims[-1]]


# --------------------------------- main ---------------------------------------
if __name__ == "__main__":
    key = jax.random.PRNGKey(0)
    k_x, k_adj, k_params = jax.random.split(key, 3)

    N = 16          # number of nodes
    DIM_IN = 8      # input feature dim
    DIM_OUT = 8     # encoder output dim; hidden layer width is 2*DIM_OUT
    NUM_LAYERS = 2

    x = jax.random.normal(k_x, (N, DIM_IN), jnp.float32)

    # deterministic symmetric binary adjacency (no self loops; GCN adds them)
    rnd = jax.random.uniform(k_adj, (N, N))
    adj = (rnd < 0.3).astype(jnp.float32)
    adj = jnp.maximum(adj, adj.T) * (1.0 - jnp.eye(N, dtype=jnp.float32))

    params = init_encoder_params(k_params, DIM_IN, DIM_OUT, NUM_LAYERS)

    out = encoder_forward(x, adj, params)
    out = jax.block_until_ready(out)
    assert out.shape == (N, DIM_OUT), out.shape

    # Sanity check vs. a plain-JAX f32 reference (loose tolerance: A_hat, H,
    # W and XW are bf16 in-kernel, accumulation is f32).
    a_hat = normalize_adj(adj)
    ref = x
    for (w, b) in params:
        ref = jnp.maximum(a_hat @ (ref @ w) + b, 0.0)
    err = float(jnp.max(jnp.abs(out - ref)))
    assert err < 0.1, err

    print("KERNEL_OK")
</pallas_src>

<mosaic_0001>
module attributes {stable_mosaic.version = 11 : i64} {
  func.func @encoder_kernel(%arg0: i32, %arg1: i32, %arg2: i32, %arg3: memref<128x128xbf16, #tpu.memory_space<vmem>>, %arg4: memref<128x128xbf16, #tpu.memory_space<any>>, %arg5: memref<1x128x128xbf16, #tpu.memory_space<vmem>>, %arg6: memref<1x1x128xf32, #tpu.memory_space<vmem>>, %arg7: memref<128x128xf32, #tpu.memory_space<vmem>>, %arg8: memref<128x128xbf16, #tpu.memory_space<vmem>>, %arg9: memref<128x128xbf16, #tpu.memory_space<vmem>>, %arg10: memref<128x128xf32, #tpu.memory_space<vmem>>, %arg11: memref<!tpu.dma_semaphore, #tpu.memory_space<semaphore_mem>>) attributes {dimension_semantics = [#tpu.dimension_semantics<arbitrary>, #tpu.dimension_semantics<arbitrary>, #tpu.dimension_semantics<arbitrary>], iteration_bounds = array<i64: 2, 1, 1>, scalar_prefetch = 0 : i64, scratch_operands = 4 : i64, tpu.core_type = #tpu.core_type<tc>, window_params = [{transform_indices = @transform_0, window_bounds = array<i64: 128, 128>}, {}, {transform_indices = @transform_2, window_bounds = array<i64: 1, 128, 128>}, {transform_indices = @transform_3, window_bounds = array<i64: 1, 1, 128>}, {transform_indices = @transform_4, window_bounds = array<i64: 128, 128>}]} {
    %c0_i32 = arith.constant 0 : i32
    %0 = arith.cmpi eq, %arg0, %c0_i32 : i32
    %c0_i32_0 = arith.constant 0 : i32
    %1 = arith.cmpi eq, %arg1, %c0_i32_0 : i32
    %2 = arith.andi %0, %1 : i1
    %c0_i32_1 = arith.constant 0 : i32
    %3 = arith.cmpi eq, %arg2, %c0_i32_1 : i32
    %4 = arith.andi %2, %3 : i1
    %5 = arith.extui %4 : i1 to i32
    %c0_i32_2 = arith.constant 0 : i32
    %6 = arith.cmpi ne, %5, %c0_i32_2 : i32
    scf.if %6 {
      tpu.enqueue_dma source(%arg4 : memref<128x128xbf16, #tpu.memory_space<any>>) target(%arg9 : memref<128x128xbf16, #tpu.memory_space<vmem>>) target_semaphore(%arg11 : memref<!tpu.dma_semaphore, #tpu.memory_space<semaphore_mem>>)
      tpu.wait_dma2 semaphore(%arg11 : memref<!tpu.dma_semaphore, #tpu.memory_space<semaphore_mem>>) src(%arg4 : memref<128x128xbf16, #tpu.memory_space<any>>) dst(%arg9 : memref<128x128xbf16, #tpu.memory_space<vmem>>)
    } else {
    }
    %c0_i32_3 = arith.constant 0 : i32
    %7 = arith.cmpi sgt, %arg0, %c0_i32_3 : i32
    %c0_i32_4 = arith.constant 0 : i32
    %8 = arith.cmpi eq, %arg1, %c0_i32_4 : i32
    %9 = arith.andi %7, %8 : i1
    %c0_i32_5 = arith.constant 0 : i32
    %10 = arith.cmpi eq, %arg2, %c0_i32_5 : i32
    %11 = arith.andi %9, %10 : i1
    %12 = arith.extui %11 : i1 to i32
    %c0_i32_6 = arith.constant 0 : i32
    %13 = arith.cmpi ne, %12, %c0_i32_6 : i32
    scf.if %13 {
      %c0_17 = arith.constant 0 : index
      %c0_18 = arith.constant 0 : index
      %29 = vector.load %arg8[%c0_17, %c0_18] : memref<128x128xbf16, #tpu.memory_space<vmem>>, vector<128x128xbf16>
      %c0_19 = arith.constant 0 : index
      %c0_20 = arith.constant 0 : index
      %c0_21 = arith.constant 0 : index
      %30 = vector.load %arg5[%c0_19, %c0_20, %c0_21] : memref<1x128x128xbf16, #tpu.memory_space<vmem>>, vector<1x128x128xbf16>
      %31 = vector.shape_cast %30 : vector<1x128x128xbf16> to vector<128x128xbf16>
      %cst_22 = arith.constant dense<0.000000e+00> : vector<128x128xf32>
      %32 = tpu.matmul %29, %31, %cst_22 {dimension_numbers = #tpu.dot_dimension_numbers<[1], [0], [0], [1], [0, 0, 1, 1], [], []>} : vector<128x128xbf16>, vector<128x128xbf16>, vector<128x128xf32> -> vector<128x128xf32>
      %33 = arith.truncf %32 : vector<128x128xf32> to vector<128x128xbf16>
      %c0_23 = arith.constant 0 : index
      %c0_24 = arith.constant 0 : index
      %34 = vector.load %arg9[%c0_23, %c0_24] : memref<128x128xbf16, #tpu.memory_space<vmem>>, vector<128x128xbf16>
      tpu.vector_store %arg9[%c0_23, %c0_24], %33 {strides = array<i32>} : memref<128x128xbf16, #tpu.memory_space<vmem>>, vector<128x128xbf16>,
    } else {
    }
    %c0_i32_7 = arith.constant 0 : i32
    %14 = arith.cmpi eq, %arg2, %c0_i32_7 : i32
    %15 = arith.extui %14 : i1 to i32
    %c0_i32_8 = arith.constant 0 : i32
    %16 = arith.cmpi ne, %15, %c0_i32_8 : i32
    scf.if %16 {
      %cst_17 = arith.constant 0.000000e+00 : f32
      %29 = vector.broadcast %cst_17 : f32 to vector<128x128xf32>
      %c0_18 = arith.constant 0 : index
      %c0_19 = arith.constant 0 : index
      %30 = vector.load %arg10[%c0_18, %c0_19] : memref<128x128xf32, #tpu.memory_space<vmem>>, vector<128x128xf32>
      tpu.vector_store %arg10[%c0_18, %c0_19], %29 {strides = array<i32>} : memref<128x128xf32, #tpu.memory_space<vmem>>, vector<128x128xf32>,
    } else {
    }
    %c128_i32 = arith.constant 128 : i32
    %17 = arith.muli %arg2, %c128_i32 : i32
    %18 = tpu.assume_multiple %17, 128 : i32
    %c0 = arith.constant 0 : index
    %c0_9 = arith.constant 0 : index
    %19 = vector.load %arg10[%c0, %c0_9] : memref<128x128xf32, #tpu.memory_space<vmem>>, vector<128x128xf32>
    %c0_10 = arith.constant 0 : index
    %c0_11 = arith.constant 0 : index
    %20 = vector.load %arg3[%c0_10, %c0_11] : memref<128x128xbf16, #tpu.memory_space<vmem>>, vector<128x128xbf16>
    %21 = arith.index_cast %18 : i32 to index
    %c0_12 = arith.constant 0 : index
    %22 = vector.load %arg9[%21, %c0_12] : memref<128x128xbf16, #tpu.memory_space<vmem>>, vector<128x128xbf16>
    %cst = arith.constant dense<0.000000e+00> : vector<128x128xf32>
    %23 = tpu.matmul %20, %22, %cst {dimension_numbers = #tpu.dot_dimension_numbers<[1], [0], [0], [1], [0, 0, 1, 1], [], []>} : vector<128x128xbf16>, vector<128x128xbf16>, vector<128x128xf32> -> vector<128x128xf32>
    %24 = arith.addf %19, %23 : vector<128x128xf32>
    %c0_13 = arith.constant 0 : index
    %c0_14 = arith.constant 0 : index
    %25 = vector.load %arg10[%c0_13, %c0_14] : memref<128x128xf32, #tpu.memory_space<vmem>>, vector<128x128xf32>
    tpu.vector_store %arg10[%c0_13, %c0_14], %24 {strides = array<i32>} : memref<128x128xf32, #tpu.memory_space<vmem>>, vector<128x128xf32>,
    %c0_i32_15 = arith.constant 0 : i32
    %26 = arith.cmpi eq, %arg2, %c0_i32_15 : i32
    %27 = arith.extui %26 : i1 to i32
    %c0_i32_16 = arith.constant 0 : i32
    %28 = arith.cmpi ne, %27, %c0_i32_16 : i32
    scf.if %28 {
      %c0_17 = arith.constant 0 : index
      %c0_18 = arith.constant 0 : index
      %29 = vector.load %arg10[%c0_17, %c0_18] : memref<128x128xf32, #tpu.memory_space<vmem>>, vector<128x128xf32>
      %c0_19 = arith.constant 0 : index
      %c0_20 = arith.constant 0 : index
      %c0_21 = arith.constant 0 : index
      %30 = vector.load %arg6[%c0_19, %c0_20, %c0_21] : memref<1x1x128xf32, #tpu.memory_space<vmem>>, vector<1x1x128xf32>
      %31 = vector.shape_cast %30 : vector<1x1x128xf32> to vector<1x128xf32>
      %32 = vector.broadcast %31 : vector<1x128xf32> to vector<128x128xf32>
      %33 = arith.addf %29, %32 : vector<128x128xf32>
      %cst_22 = arith.constant 0.000000e+00 : f32
      %34 = vector.broadcast %cst_22 : f32 to vector<128x128xf32>
      %35 = arith.maximumf %33, %34 : vector<128x128xf32>
      %c128_i32_23 = arith.constant 128 : i32
      %36 = arith.muli %arg1, %c128_i32_23 : i32
      %37 = tpu.assume_multiple %36, 128 : i32
      %38 = arith.truncf %35 : vector<128x128xf32> to vector<128x128xbf16>
      %39 = arith.index_cast %37 : i32 to index
      %c0_24 = arith.constant 0 : index
      %40 = vector.load %arg8[%39, %c0_24] : memref<128x128xbf16, #tpu.memory_space<vmem>>, vector<128x128xbf16>
      tpu.vector_store %arg8[%39, %c0_24], %38 {strides = array<i32>} : memref<128x128xbf16, #tpu.memory_space<vmem>>, vector<128x128xbf16>,
      %c1_i32 = arith.constant 1 : i32
      %41 = arith.cmpi eq, %arg0, %c1_i32 : i32
      %42 = arith.extui %41 : i1 to i32
      %c0_i32_25 = arith.constant 0 : i32
      %43 = arith.cmpi ne, %42, %c0_i32_25 : i32
      scf.if %43 {
        %c0_26 = arith.constant 0 : index
        %c0_27 = arith.constant 0 : index
        %44 = vector.load %arg7[%c0_26, %c0_27] : memref<128x128xf32, #tpu.memory_space<vmem>>, vector<128x128xf32>
        tpu.vector_store %arg7[%c0_26, %c0_27], %35 {strides = array<i32>} : memref<128x128xf32, #tpu.memory_space<vmem>>, vector<128x128xf32>,
      } else {
      }
    } else {
    }
    return
  }
  func.func @transform_0(%arg0: i32, %arg1: i32, %arg2: i32) -> (i32, i32) {
    %c0_i32 = arith.constant 0 : i32
    return %arg1, %arg2 : i32, i32
  }
  func.func @transform_2(%arg0: i32, %arg1: i32, %arg2: i32) -> (i32, i32, i32) {
    %c1_i32 = arith.constant 1 : i32
    %0 = arith.subi %arg0, %c1_i32 : i32
    %c0_i32 = arith.constant 0 : i32
    %1 = arith.maxsi %0, %c0_i32 : i32
    %c0_i32_0 = arith.constant 0 : i32
    %c0_i32_1 = arith.constant 0 : i32
    %c0_i32_2 = arith.constant 0 : i32
    return %1, %c0_i32_0, %c0_i32_1 : i32, i32, i32
  }
  func.func @transform_3(%arg0: i32, %arg1: i32, %arg2: i32) -> (i32, i32, i32) {
    %c0_i32 = arith.constant 0 : i32
    %c0_i32_0 = arith.constant 0 : i32
    %c0_i32_1 = arith.constant 0 : i32
    return %arg0, %c0_i32, %c0_i32_0 : i32, i32, i32
  }
  func.func @transform_4(%arg0: i32, %arg1: i32, %arg2: i32) -> (i32, i32) {
    %c0_i32 = arith.constant 0 : i32
    %c0_i32_0 = arith.constant 0 : i32
    return %arg1, %c0_i32 : i32, i32
  }
}

</mosaic_0001>

<llo_original>
// kernel: tpu_custom_call.1
$region0: #{tpu_custom_call.1}
  #allocation0 [shape = 'u32[]', space=smem, size = 0x4, offset = 0x4, fixed_abs, tag = 'smem constant byte address 0x4 - core index']
  #allocation1 [shape = 'u32[144,128]{1,0:T(1,128)}', space=vmem, size = 0x12000, scoped, tag = 'internal scratch']
  #allocation2 [shape = 'bf16[128,128]{1,0:T(16,128)(2,1)}', space=vmem, size = 0x8000, scoped, tag = 'scratch operand']
  #allocation3 [shape = 'bf16[128,128]{1,0:T(16,128)(2,1)}', space=vmem, size = 0x8000, scoped, tag = 'scratch operand']
  #allocation4 [shape = 'f32[128,128]{1,0:T(8,128)}', space=vmem, size = 0x10000, scoped, tag = 'scratch operand']
  #allocation5 [shape = 's32[1]{0}', space=sflag, size = 0x4, scoped, tag = 'scratch operand']
  #allocation12 [shape = 's32[]', space=sflag, size = 0x4, offset = 0, fixed_abs, tag = 'sflag constant byte address 0x0 - dummy sync flag']
  #allocation13 [shape = 's32[]', space=sflag, size = 0x4, offset = 0, fixed_abs, tag = 'sflag constant byte address 0x0 - dummy sync flag']
  #allocation14 [shape = 'u32[]', space=smem, size = 0x4, offset = 0x44, fixed_abs, tag = 'smem constant byte address 0x44 - assertion arg 0']
  #allocation15 [shape = 'u32[]', space=smem, size = 0x4, offset = 0x48, fixed_abs, tag = 'smem constant byte address 0x48 - assertion arg 1']
  %s0 = inlined_call_operand.hbm [shape: bf16[128,128], index: 0, kind: input, shape index: {}]
  %s1 = inlined_call_operand.hbm [shape: bf16[128,128], index: 1, kind: input, shape index: {}]
  %s2 = inlined_call_operand.hbm [shape: bf16[1,128,128], index: 2, kind: input, shape index: {}]
  %s3 = inlined_call_operand.vmem [shape: f32[2,1,128], index: 3, kind: input, shape index: {}]
  %s4 = inlined_call_operand.hbm [shape: f32[128,128], index: 4, kind: output, shape index: {}]
  %s5 = sld [smem:[#allocation0]]
  $region77: #{tpu_custom_call.1} parent=0
    _
  %s7 = ssub.s32 1, %s5
  %s8 = scalar_select 0, %s7, %s5
  $region1: #{tpu_custom_call.1} parent=0
    #allocation6 [shape = 'u8[32768]{0}', space=vmem, size = 0x8000, scoped, tag = 'input window, operand 0, single buffered']
    #allocation7 [shape = 's32[2]{0}', space=sflag, size = 0x8, scoped, tag = 'scoped memory for tpu_custom_call.1']
    #allocation8 [shape = 's32[2]{0}', space=sflag, size = 0x8, scoped, tag = 'scoped memory for tpu_custom_call.1']
    #allocation9 [shape = 'u8[65536]{0}', space=vmem, size = 0x10000, scoped, tag = 'input window, operand 2']
    #allocation10 [shape = 's32[2]{0}', space=sflag, size = 0x8, scoped, tag = 'scoped memory for tpu_custom_call.1']
    #allocation11 [shape = 'u8[65536]{0}', space=vmem, size = 0x10000, scoped, tag = 'output window, operand 0, single buffered']
    %9 = vsyncpa [#allocation7], 0
    %10 = vsyncpa [#allocation10], 0
    %s11 = scalar_lea.sflag [#allocation10], 1
    %12 = vsyncpa %s11, 0
    %13 = vsyncpa [#allocation8], 0
    loop: start=0, step=1, limit=4
    $region2: #{tpu_custom_call.1} parent=1 // loop_pre_header
      _
    $region3: #{tpu_custom_call.1} parent=1 // loop_header
      %s15 = sphi 0, %s19
      %p16 = scmp.ge.s32.totalorder %s15, 4
      %s22 = sphi 0, %s41
      %s23 = sphi 0, %s37
      %s24 = sphi 0, %s33
      %s25 = sphi 0, %s22
      %s26 = sphi 0, %s23
      %s27 = sphi 0, %s24
      %s28 = sphi 0, %s25
      %s29 = sphi 0, %s26
      %s30 = sphi 0, %s27
      %s46 = sphi 0, %s48
      %s49 = sphi 0, %s46
      %s50 = sphi 0, %s49
      %s66 = sphi 0, %s50
      %s78 = sphi 0, %s80
      %s81 = sphi 0, %s78
      %s82 = sphi 0, %s81
      %s98 = sphi 0, %s82
      %s104 = sphi 0, %s106
      %s107 = sphi 0, %s104
      %s108 = sphi 0, %s107
      %s124 = sphi 0, %s108
      %s130 = sphi 0, %s132
      %s133 = sphi 0, %s130
      %s134 = sphi 0, %s133
      %s150 = sphi 0, %s134
    $region4: #{tpu_custom_call.1} parent=1 // loop_header_branch
      %18 = sbr.rel (%p16) target = $region8
    $region5: #{tpu_custom_call.1} parent=1 // loop_body
      %s20 = ssub.s32 %s15, 1
      %s21 = ssub.s32 %s15, 2
      %s31 = sadd.s32 1, %s24
      %p32 = scmp.ge.s32.totalorder %s31, 1
      %s33 = scalar_select %p32, 0, %s31
      %s34 = sadd.s32 1, %s23
      %s35 = scalar_select %p32, %s34, %s23
      %p36 = scmp.ge.s32.totalorder %s35, 1
      %s37 = scalar_select %p36, 0, %s35
      %s38 = sadd.s32 1, %s22
      %s39 = scalar_select %p36, %s38, %s22
      %p40 = scmp.ge.s32.totalorder %s39, 2
      %s41 = scalar_select %p40, 0, %s39
      %s42 = ssub.s32 %s23, %s37
      %s43 = ssub.s32 %s24, %s33
      %s44 = sor.u32 %s42, %s43
      %p45 = scmp.eq.s32.totalorder %s44, 0
      %s47 = sadd.s32 %s46, 1
      %s48 = scalar_select %p45, %s46, %s47
      %p51 = pneg %p45
      %p52 = scmp.eq.s32.totalorder %s15, 1
      %p53 = por %p51, %p52
      %p54 = scmp.ne.s32.totalorder %s46, %s49
      %p55 = scmp.eq.s32.totalorder %s15, 0
      %p56 = por %p54, %p55
      %p57 = scmp.ne.s32.totalorder %s46, %s49
      %p58 = scmp.eq.s32.totalorder %s20, 1
      %p59 = por %p57, %p58
      %p60 = scmp.ne.s32.totalorder %s49, %s50
      %p61 = scmp.eq.s32.totalorder %s20, 0
      %p62 = por %p60, %p61
      %p63 = scmp.ne.s32.totalorder %s49, %s50
      %p64 = scmp.eq.s32.totalorder %s21, 1
      %p65 = por %p63, %p64
      %p67 = scmp.ne.s32.totalorder %s50, %s66
      %p68 = scmp.eq.s32.totalorder %s21, 0
      %p69 = por %p67, %p68
      %s70 = ssub.s32 %s22, 1
      %p71 = scmp.gt.s32.totalorder %s70, 0
      %s72 = scalar_select %p71, %s70, 0
      %s73 = ssub.s32 %s41, 1
      %p74 = scmp.gt.s32.totalorder %s73, 0
      %s75 = scalar_select %p74, %s73, 0
      %s76 = ssub.s32 %s72, %s75
      %p77 = scmp.eq.s32.totalorder %s76, 0
      %s79 = sadd.s32 %s78, 1
      %s80 = scalar_select %p77, %s78, %s79
      %p83 = pneg %p77
      %p84 = scmp.eq.s32.totalorder %s15, 1
      %p85 = por %p83, %p84
      %p86 = scmp.ne.s32.totalorder %s78, %s81
      %p87 = scmp.eq.s32.totalorder %s15, 0
      %p88 = por %p86, %p87
      %p89 = scmp.ne.s32.totalorder %s78, %s81
      %p90 = scmp.eq.s32.totalorder %s20, 1
      %p91 = por %p89, %p90
      %p92 = scmp.ne.s32.totalorder %s81, %s82
      %p93 = scmp.eq.s32.totalorder %s20, 0
      %p94 = por %p92, %p93
      %p95 = scmp.ne.s32.totalorder %s81, %s82
      %p96 = scmp.eq.s32.totalorder %s21, 1
      %p97 = por %p95, %p96
      %p99 = scmp.ne.s32.totalorder %s82, %s98
      %p100 = scmp.eq.s32.totalorder %s21, 0
      %p101 = por %p99, %p100
      %s102 = ssub.s32 %s22, %s41
      %p103 = scmp.eq.s32.totalorder %s102, 0
      %s105 = sadd.s32 %s104, 1
      %s106 = scalar_select %p103, %s104, %s105
      %p109 = pneg %p103
      %p110 = scmp.eq.s32.totalorder %s15, 1
      %p111 = por %p109, %p110
      %p112 = scmp.ne.s32.totalorder %s104, %s107
      %p113 = scmp.eq.s32.totalorder %s15, 0
      %p114 = por %p112, %p113
      %p115 = scmp.ne.s32.totalorder %s104, %s107
      %p116 = scmp.eq.s32.totalorder %s20, 1
      %p117 = por %p115, %p116
      %p118 = scmp.ne.s32.totalorder %s107, %s108
      %p119 = scmp.eq.s32.totalorder %s20, 0
      %p120 = por %p118, %p119
      %p121 = scmp.ne.s32.totalorder %s107, %s108
      %p122 = scmp.eq.s32.totalorder %s21, 1
      %p123 = por %p121, %p122
      %p125 = scmp.ne.s32.totalorder %s108, %s124
      %p126 = scmp.eq.s32.totalorder %s21, 0
      %p127 = por %p125, %p126
      %s128 = ssub.s32 %s23, %s37
      %p129 = scmp.eq.s32.totalorder %s128, 0
      %s131 = sadd.s32 %s130, 1
      %s132 = scalar_select %p129, %s130, %s131
      %p135 = pneg %p129
      %p136 = scmp.eq.s32.totalorder %s15, 1
      %p137 = por %p135, %p136
      %p138 = scmp.ne.s32.totalorder %s130, %s133
      %p139 = scmp.eq.s32.totalorder %s15, 0
      %p140 = por %p138, %p139
      %p141 = scmp.ne.s32.totalorder %s130, %s133
      %p142 = scmp.eq.s32.totalorder %s20, 1
      %p143 = por %p141, %p142
      %p144 = scmp.ne.s32.totalorder %s133, %s134
      %p145 = scmp.eq.s32.totalorder %s20, 0
      %p146 = por %p144, %p145
      %p147 = scmp.ne.s32.totalorder %s133, %s134
      %p148 = scmp.eq.s32.totalorder %s21, 1
      %p149 = por %p147, %p148
      %p151 = scmp.ne.s32.totalorder %s134, %s150
      %p152 = scmp.eq.s32.totalorder %s21, 0
      %p153 = por %p151, %p152
      %p154 = scmp.le.s32.totalorder 1, %s15
      %p155 = scmp.lt.s32.totalorder %s15, 3
      %p156 = pnand %p154, %p155
      %p157 = pneg %p156
      // Predicated region
      $region9: #{tpu_custom_call.1} parent=5 // pred_check
        _
      $region10: #{tpu_custom_call.1} parent=5 // pred_check_branch
        %159 = sbr.rel (%p156) target = $region12
      $region11: #{tpu_custom_call.1} parent=5 // pred_region
        %s160 = ssub.s32 %s15, 1
        // Predicated region
        $region13: #{tpu_custom_call.1} parent=11 // pred_check
          %p161 = pneg %p62
        $region14: #{tpu_custom_call.1} parent=11 // pred_check_branch
          %163 = sbr.rel (%p161) target = $region16
        $region15: #{tpu_custom_call.1} parent=11 // pred_region
          %s164 = smul.u32 16, %s26
          %s166 = ssub.s32 1024, 1024
          %167 = vsyncadd [#allocation7], %s166
          %s168 = sadd.s32 %s27, %s164
          %s169 = smul.addr %s168, 64
          %s170 = scalar_lea.hbm %s0, %s169
          %s171 = sshll.u32 [#allocation6], 4
          %s172 = int_to_ptr.vmem [resolvable:$true] %s171
          %177 = dma.hbm_to_vmem [thread:$0]  %s170, 1024, %s172, [#allocation7], 64, 64, 4
        $region16: #{tpu_custom_call.1} parent=11 // pred_fallthru
          _
      $region12: #{tpu_custom_call.1} parent=5 // pred_fallthru
        _
      %p178 = scmp.lt.s32.totalorder %s15, 2
      // Predicated region
      $region17: #{tpu_custom_call.1} parent=5 // pred_check
        %p179 = pneg %p178
      $region18: #{tpu_custom_call.1} parent=5 // pred_check_branch
        %181 = sbr.rel (%p179) target = $region20
      $region19: #{tpu_custom_call.1} parent=5 // pred_region
        // Predicated region
        $region21: #{tpu_custom_call.1} parent=19 // pred_check
          %p182 = pneg %p88
        $region22: #{tpu_custom_call.1} parent=19 // pred_check_branch
          %184 = sbr.rel (%p182) target = $region24
        $region23: #{tpu_custom_call.1} parent=19 // pred_region
          %s185 = sand.u32 %s78, 1
          %s186 = scalar_lea.sflag [#allocation10], %s185
          %s187 = sand.u32 %s78, 1
          %s188 = smul.addr %s187, 64
          %s189 = scalar_lea.vmem [#allocation9], %s188
          %s190 = ssub.s32 %s22, 1
          %p191 = scmp.gt.s32.totalorder %s190, 0
          %s192 = scalar_select %p191, %s190, 0
          %s194 = ssub.s32 1024, 1024
          %195 = vsyncadd %s186, %s194
          %s196 = smul.addr %s192, 16
          %s197 = smul.addr %s196, 64
          %s198 = scalar_lea.hbm %s2, %s197
          %s199 = sshll.u32 %s189, 4
          %s200 = int_to_ptr.vmem [resolvable:$true] %s199
          %205 = dma.hbm_to_vmem [thread:$0]  %s198, 1024, %s200, %s186, 64, 64, 4
        $region24: #{tpu_custom_call.1} parent=19 // pred_fallthru
          _
        // Predicated region
        $region25: #{tpu_custom_call.1} parent=19 // pred_check
          %p206 = pneg %p114
        $region26: #{tpu_custom_call.1} parent=19 // pred_check_branch
          %208 = sbr.rel (%p206) target = $region28
        $region27: #{tpu_custom_call.1} parent=19 // pred_region
          %p209 = scmp.lt.s32.totalorder %s22, 1
          %s210 = scalar_select %p209, %s22, 1
          %s211 = scalar_lea.vmem %s3, %s210
        $region28: #{tpu_custom_call.1} parent=19 // pred_fallthru
          _
      $region20: #{tpu_custom_call.1} parent=5 // pred_fallthru
        _
      %p212 = scmp.le.s32.totalorder 1, %s15
      %p213 = scmp.lt.s32.totalorder %s15, 3
      %p214 = pnand %p212, %p213
      %p215 = pneg %p214
      // Predicated region
      $region29: #{tpu_custom_call.1} parent=5 // pred_check
        _
      $region30: #{tpu_custom_call.1} parent=5 // pred_check_branch
        %217 = sbr.rel (%p214) target = $region32
      $region31: #{tpu_custom_call.1} parent=5 // pred_region
        %s218 = ssub.s32 %s15, 1
        // Predicated region
        $region33: #{tpu_custom_call.1} parent=31 // pred_check
          %p219 = pneg %p62
        $region34: #{tpu_custom_call.1} parent=31 // pred_check_branch
          %221 = sbr.rel (%p219) target = $region36
        $region35: #{tpu_custom_call.1} parent=31 // pred_region
          %222 = dma.done [#allocation7], 1024
        $region36: #{tpu_custom_call.1} parent=31 // pred_fallthru
          _
        %s223 = sand.u32 %s81, 1
        %s224 = scalar_lea.sflag [#allocation10], %s223
        %s225 = sand.u32 %s81, 1
        %s226 = smul.addr %s225, 64
        %s227 = scalar_lea.vmem [#allocation9], %s226
        // Predicated region
        $region37: #{tpu_custom_call.1} parent=31 // pred_check
          %p228 = pneg %p94
        $region38: #{tpu_custom_call.1} parent=31 // pred_check_branch
          %230 = sbr.rel (%p228) target = $region40
        $region39: #{tpu_custom_call.1} parent=31 // pred_region
          %231 = dma.done %s224, 1024
        $region40: #{tpu_custom_call.1} parent=31 // pred_fallthru
          _
        %p232 = pneg %p62
        %p233 = pneg %p59
        %s234 = sand.u32 %s81, 1
        %s235 = scalar_lea.sflag [#allocation10], %s234
        %s236 = sand.u32 %s81, 1
        %s237 = smul.addr %s236, 64
        %s238 = scalar_lea.vmem [#allocation9], %s237
        %p239 = pneg %p94
        %p240 = pneg %p91
        %p241 = scmp.lt.s32.totalorder %s25, 1
        %s242 = scalar_select %p241, %s25, 1
        %s243 = scalar_lea.vmem %s3, %s242
        %p244 = pneg %p120
        %p245 = pneg %p117
        %p246 = pneg %p146
        %p247 = pneg %p143
        %s248 = smul.u32 16, %s26
        %s249 = ssub.s32 %s25, 1
        %p250 = scmp.gt.s32.totalorder %s249, 0
        %s251 = scalar_select %p250, %s249, 0
        %p252 = scmp.lt.s32.totalorder %s25, 1
        %s253 = scalar_select %p252, %s25, 1
        %s254 = scalar_lea.vmem %s3, %s253
        %s255 = smul.u32 16, %s26
        %p257 = scmp.eq.s32.totalorder %s25, 0
        %p258 = scmp.eq.s32.totalorder %s26, 0
        %p259 = pnand %p257, %p258
        %p260 = pneg %p259
        %p261 = scmp.eq.s32.totalorder %s27, 0
        %p262 = pnand %p260, %p261
        %p263 = pneg %p262
        // Predicated region
        $region41: #{tpu_custom_call.1} parent=31 // pred_check
          _
        $region42: #{tpu_custom_call.1} parent=31 // pred_check_branch
          %265 = sbr.rel (%p262) target = $region44
        $region43: #{tpu_custom_call.1} parent=31 // pred_region
          // Predicated region
          $region45: #{tpu_custom_call.1} parent=43 // pred_check
            _
          $region46: #{tpu_custom_call.1} parent=43 // pred_check_branch
            %267 = sbr.rel target = $region48
          $region47: #{tpu_custom_call.1} parent=43 // pred_region
            %268 = sst [smem:[#allocation14]] [#allocation13]
            %269 = sst [smem:[#allocation15]] [#allocation12]
          $region48: #{tpu_custom_call.1} parent=43 // pred_fallthru
            _
          %271 = shalt.err (0)
          %s273 = sshll.u32 [#allocation3], 4
          %s274 = int_to_ptr.vmem [resolvable:$true] %s273
          %276 = dma.hbm_to_vmem [thread:$0]  %s1, 1024, %s274, [#allocation5]
          %s277 = smul.u32 4, 16
          %s278 = smul.u32 %s277, 1
          %s279 = sshll.u32 %s278, 4
          %280 = dma.done [#allocation5], %s279
        $region44: #{tpu_custom_call.1} parent=31 // pred_fallthru
          _
        %p281 = scmp.gt.s32.totalorder %s25, 0
        %p282 = pnand %p281, %p258
        %p283 = pneg %p282
        %p284 = pnand %p283, %p261
        %p285 = pneg %p284
        // Predicated region
        $region49: #{tpu_custom_call.1} parent=31 // pred_check
          _
        $region50: #{tpu_custom_call.1} parent=31 // pred_check_branch
          %287 = sbr.rel (%p284) target = $region52
        $region51: #{tpu_custom_call.1} parent=31 // pred_region
          %v288 = vld [vmem:[#allocation2] sm:$0xff]
          %v289 = vld [vmem:[#allocation2 + $0x8] sm:$0xff]
          %v290 = vld [vmem:[#allocation2 + $0x10] sm:$0xff]
          %v291 = vld [vmem:[#allocation2 + $0x18] sm:$0xff]
          %v292 = vld [vmem:[#allocation2 + $0x20] sm:$0xff]
          %v293 = vld [vmem:[#allocation2 + $0x28] sm:$0xff]
          %v294 = vld [vmem:[#allocation2 + $0x30] sm:$0xff]
          %v295 = vld [vmem:[#allocation2 + $0x38] sm:$0xff]
          %v296 = vld [vmem:[%s227] sm:$0xf]
          %v297 = vld [vmem:[%s227 + $0x4] sm:$0xf]
          %v298 = vld [vmem:[%s227 + $0x8] sm:$0xf]
          %v299 = vld [vmem:[%s227 + $0xc] sm:$0xf]
          %v300 = vld [vmem:[%s227 + $0x10] sm:$0xf]
          %v301 = vld [vmem:[%s227 + $0x14] sm:$0xf]
          %v302 = vld [vmem:[%s227 + $0x18] sm:$0xf]
          %v303 = vld [vmem:[%s227 + $0x1c] sm:$0xf]
          %v304 = vld [vmem:[%s227 + $0x20] sm:$0xf]
          %v305 = vld [vmem:[%s227 + $0x24] sm:$0xf]
          %v306 = vld [vmem:[%s227 + $0x28] sm:$0xf]
          %v307 = vld [vmem:[%s227 + $0x2c] sm:$0xf]
          %v308 = vld [vmem:[%s227 + $0x30] sm:$0xf]
          %v309 = vld [vmem:[%s227 + $0x34] sm:$0xf]
          %v310 = vld [vmem:[%s227 + $0x38] sm:$0xf]
          %v311 = vld [vmem:[%s227 + $0x3c] sm:$0xf]
          %v328 = vunpack.c.l.b16 %v296
          %v329 = vunpack.c.l.b16 %v297
          %v330 = vunpack.c.l.b16 %v298
          %v331 = vunpack.c.l.b16 %v299
          %v332 = vunpack.c.l.b16 %v300
          %v333 = vunpack.c.l.b16 %v301
          %v334 = vunpack.c.l.b16 %v302
          %v335 = vunpack.c.l.b16 %v303
          %v336 = vunpack.c.l.b16 %v304
          %v337 = vunpack.c.l.b16 %v305
          %v338 = vunpack.c.l.b16 %v306
          %v339 = vunpack.c.l.b16 %v307
          %v340 = vunpack.c.l.b16 %v308
          %v341 = vunpack.c.l.b16 %v309
          %v342 = vunpack.c.l.b16 %v310
          %v343 = vunpack.c.l.b16 %v311
          %v344 = vpack.c.b16 %v329, %v328
          %v345 = vpack.c.b16 %v331, %v330
          %v346 = vpack.c.b16 %v333, %v332
          %v347 = vpack.c.b16 %v335, %v334
          %v348 = vpack.c.b16 %v337, %v336
          %v349 = vpack.c.b16 %v339, %v338
          %v350 = vpack.c.b16 %v341, %v340
          %v351 = vpack.c.b16 %v343, %v342
          %360 = vmatprep.subr.bf16.mxu0 0
          %361 = vmatpush1.bf16.msra.mxu0 %v344
          %362 = vmatprep.subr.bf16.mxu0 0
          %363 = vmatpush1.bf16.msra.mxu0 %v345
          %364 = vmatprep.subr.bf16.mxu0 0
          %365 = vmatpush1.bf16.msra.mxu0 %v346
          %366 = vmatprep.subr.bf16.mxu0 0
          %367 = vmatpush1.bf16.msra.mxu0 %v347
          %368 = vmatprep.subr.bf16.mxu0 0
          %369 = vmatpush1.bf16.msra.mxu0 %v348
          %370 = vmatprep.subr.bf16.mxu0 0
          %371 = vmatpush1.bf16.msra.mxu0 %v349
          %372 = vmatprep.subr.bf16.mxu0 0
          %373 = vmatpush1.bf16.msra.mxu0 %v350
          %374 = vmatprep.subr.bf16.mxu0 0
          %375 = vmatpush1.bf16.msra.mxu0 %v351
          %376 = vmatprep.subr.bf16.mxu0 0
          %377 = vmatpush1.bf16.msra.mxu0 0
          %378 = vmatprep.subr.bf16.mxu0 0
          %379 = vmatpush1.bf16.msra.mxu0 0
          %380 = vmatprep.subr.bf16.mxu0 0
          %381 = vmatpush1.bf16.msra.mxu0 0
          %382 = vmatprep.subr.bf16.mxu0 0
          %383 = vmatpush1.bf16.msra.mxu0 0
          %384 = vmatprep.subr.bf16.mxu0 0
          %385 = vmatpush1.bf16.msra.mxu0 0
          %386 = vmatprep.subr.bf16.mxu0 0
          %387 = vmatpush1.bf16.msra.mxu0 0
          %388 = vmatprep.subr.bf16.mxu0 0
          %389 = vmatpush1.bf16.msra.mxu0 0
          %390 = vmatprep.subr.bf16.mxu0 0
          %391 = vmatpush1.bf16.msra.mxu0 0
          %392 = vmatprep.mubr.bf16.mxu0 0
          %393 = vmatmul.mubr.bf16.gmra.mrb[0].mxu0 %v288
          %v394 = vpop.f32.mrb[0].mxu0
          %v395 = vadd.f32 0.0, %v394
          %v396 = vpop.f32.mrb[0].mxu0
          %v397 = vpop.f32.mrb[0].mxu0
          %v398 = vadd.f32 0.0, %v397
          %v399 = vpop.f32.mrb[0].mxu0
          %400 = vmatprep.mubr.bf16.mxu0 0
          %401 = vmatmul.mubr.bf16.gmra.mrb[0].mxu0 %v289
          %v402 = vpop.f32.mrb[0].mxu0
          %v403 = vadd.f32 0.0, %v402
          %v404 = vpop.f32.mrb[0].mxu0
          %v405 = vpop.f32.mrb[0].mxu0
          %v406 = vadd.f32 0.0, %v405
          %v407 = vpop.f32.mrb[0].mxu0
          %408 = vmatprep.mubr.bf16.mxu0 0
          %409 = vmatmul.mubr.bf16.gmra.mrb[0].mxu0 %v290
          %v410 = vpop.f32.mrb[0].mxu0
          %v411 = vadd.f32 0.0, %v410
          %v412 = vpop.f32.mrb[0].mxu0
          %v413 = vpop.f32.mrb[0].mxu0
          %v414 = vadd.f32 0.0, %v413
          %v415 = vpop.f32.mrb[0].mxu0
          %416 = vmatprep.mubr.bf16.mxu0 0
          %417 = vmatmul.mubr.bf16.gmra.mrb[0].mxu0 %v291
          %v418 = vpop.f32.mrb[0].mxu0
          %v419 = vadd.f32 0.0, %v418
          %v420 = vpop.f32.mrb[0].mxu0
          %v421 = vpop.f32.mrb[0].mxu0
          %v422 = vadd.f32 0.0, %v421
          %v423 = vpop.f32.mrb[0].mxu0
          %424 = vmatprep.mubr.bf16.mxu0 0
          %425 = vmatmul.mubr.bf16.gmra.mrb[0].mxu0 %v292
          %v426 = vpop.f32.mrb[0].mxu0
          %v427 = vadd.f32 0.0, %v426
          %v428 = vpop.f32.mrb[0].mxu0
          %v429 = vpop.f32.mrb[0].mxu0
          %v430 = vadd.f32 0.0, %v429
          %v431 = vpop.f32.mrb[0].mxu0
          %432 = vmatprep.mubr.bf16.mxu0 0
          %433 = vmatmul.mubr.bf16.gmra.mrb[0].mxu0 %v293
          %v434 = vpop.f32.mrb[0].mxu0
          %v435 = vadd.f32 0.0, %v434
          %v436 = vpop.f32.mrb[0].mxu0
          %v437 = vpop.f32.mrb[0].mxu0
          %v438 = vadd.f32 0.0, %v437
          %v439 = vpop.f32.mrb[0].mxu0
          %440 = vmatprep.mubr.bf16.mxu0 0
          %441 = vmatmul.mubr.bf16.gmra.mrb[0].mxu0 %v294
          %v442 = vpop.f32.mrb[0].mxu0
          %v443 = vadd.f32 0.0, %v442
          %v444 = vpop.f32.mrb[0].mxu0
          %v445 = vpop.f32.mrb[0].mxu0
          %v446 = vadd.f32 0.0, %v445
          %v447 = vpop.f32.mrb[0].mxu0
          %448 = vmatprep.mubr.bf16.mxu0 0
          %449 = vmatmul.mubr.bf16.gmra.mrb[0].mxu0 %v295
          %v450 = vpop.f32.mrb[0].mxu0
          %v451 = vadd.f32 0.0, %v450
          %v452 = vpop.f32.mrb[0].mxu0
          %v453 = vpop.f32.mrb[0].mxu0
          %v454 = vadd.f32 0.0, %v453
          %v455 = vpop.f32.mrb[0].mxu0
          %456 = vdwg.mxu0
          %v457 = vpack.c.bf16 %v398, %v395
          %v458 = vpack.c.bf16 %v406, %v403
          %v459 = vpack.c.bf16 %v414, %v411
          %v460 = vpack.c.bf16 %v422, %v419
          %v461 = vpack.c.bf16 %v430, %v427
          %v462 = vpack.c.bf16 %v438, %v435
          %v463 = vpack.c.bf16 %v446, %v443
          %v464 = vpack.c.bf16 %v454, %v451
          %465 = vst [vmem:[#allocation3] sm:$0xff] %v457
          %466 = vst [vmem:[#allocation3 + $0x8] sm:$0xff] %v458
          %467 = vst [vmem:[#allocation3 + $0x10] sm:$0xff] %v459
          %468 = vst [vmem:[#allocation3 + $0x18] sm:$0xff] %v460
          %469 = vst [vmem:[#allocation3 + $0x20] sm:$0xff] %v461
          %470 = vst [vmem:[#allocation3 + $0x28] sm:$0xff] %v462
          %471 = vst [vmem:[#allocation3 + $0x30] sm:$0xff] %v463
          %472 = vst [vmem:[#allocation3 + $0x38] sm:$0xff] %v464
        $region52: #{tpu_custom_call.1} parent=31 // pred_fallthru
          _
        // Predicated region
        $region53: #{tpu_custom_call.1} parent=31 // pred_check
          %p473 = pneg %p261
        $region54: #{tpu_custom_call.1} parent=31 // pred_check_branch
          %475 = sbr.rel (%p473) target = $region56
        $region55: #{tpu_custom_call.1} parent=31 // pred_region
          %476 = vst [vmem:[#allocation4] sm:$0xff] 0.0
          %477 = vst [vmem:[#allocation4 + $0x8] sm:$0xff] 0.0
          %478 = vst [vmem:[#allocation4 + $0x10] sm:$0xff] 0.0
          %479 = vst [vmem:[#allocation4 + $0x18] sm:$0xff] 0.0
          %480 = vst [vmem:[#allocation4 + $0x20] sm:$0xff] 0.0
          %481 = vst [vmem:[#allocation4 + $0x28] sm:$0xff] 0.0
          %482 = vst [vmem:[#allocation4 + $0x30] sm:$0xff] 0.0
          %483 = vst [vmem:[#allocation4 + $0x38] sm:$0xff] 0.0
          %484 = vst [vmem:[#allocation4 + $0x40] sm:$0xff] 0.0
          %485 = vst [vmem:[#allocation4 + $0x48] sm:$0xff] 0.0
          %486 = vst [vmem:[#allocation4 + $0x50] sm:$0xff] 0.0
          %487 = vst [vmem:[#allocation4 + $0x58] sm:$0xff] 0.0
          %488 = vst [vmem:[#allocation4 + $0x60] sm:$0xff] 0.0
          %489 = vst [vmem:[#allocation4 + $0x68] sm:$0xff] 0.0
          %490 = vst [vmem:[#allocation4 + $0x70] sm:$0xff] 0.0
          %491 = vst [vmem:[#allocation4 + $0x78] sm:$0xff] 0.0
        $region56: #{tpu_custom_call.1} parent=31 // pred_fallthru
          _
        %s492 = smul.u32 %s27, 128
        %v493 = vld [vmem:[#allocation4] sm:$0xff]
        %v494 = vld [vmem:[#allocation4 + $0x8] sm:$0xff]
        %v495 = vld [vmem:[#allocation4 + $0x10] sm:$0xff]
        %v496 = vld [vmem:[#allocation4 + $0x18] sm:$0xff]
        %v497 = vld [vmem:[#allocation4 + $0x20] sm:$0xff]
        %v498 = vld [vmem:[#allocation4 + $0x28] sm:$0xff]
        %v499 = vld [vmem:[#allocation4 + $0x30] sm:$0xff]
        %v500 = vld [vmem:[#allocation4 + $0x38] sm:$0xff]
        %v501 = vld [vmem:[#allocation4 + $0x40] sm:$0xff]
        %v502 = vld [vmem:[#allocation4 + $0x48] sm:$0xff]
        %v503 = vld [vmem:[#allocation4 + $0x50] sm:$0xff]
        %v504 = vld [vmem:[#allocation4 + $0x58] sm:$0xff]
        %v505 = vld [vmem:[#allocation4 + $0x60] sm:$0xff]
        %v506 = vld [vmem:[#allocation4 + $0x68] sm:$0xff]
        %v507 = vld [vmem:[#allocation4 + $0x70] sm:$0xff]
        %v508 = vld [vmem:[#allocation4 + $0x78] sm:$0xff]
        %v509 = vld [vmem:[#allocation6] sm:$0xf]
        %v510 = vld [vmem:[#allocation6 + $0x4] sm:$0xf]
        %v511 = vld [vmem:[#allocation6 + $0x8] sm:$0xf]
        %v512 = vld [vmem:[#allocation6 + $0xc] sm:$0xf]
        %v513 = vld [vmem:[#allocation6 + $0x10] sm:$0xf]
        %v514 = vld [vmem:[#allocation6 + $0x14] sm:$0xf]
        %v515 = vld [vmem:[#allocation6 + $0x18] sm:$0xf]
        %v516 = vld [vmem:[#allocation6 + $0x1c] sm:$0xf]
        %v517 = vld [vmem:[#allocation6 + $0x20] sm:$0xf]
        %v518 = vld [vmem:[#allocation6 + $0x24] sm:$0xf]
        %v519 = vld [vmem:[#allocation6 + $0x28] sm:$0xf]
        %v520 = vld [vmem:[#allocation6 + $0x2c] sm:$0xf]
        %v521 = vld [vmem:[#allocation6 + $0x30] sm:$0xf]
        %v522 = vld [vmem:[#allocation6 + $0x34] sm:$0xf]
        %v523 = vld [vmem:[#allocation6 + $0x38] sm:$0xf]
        %v524 = vld [vmem:[#allocation6 + $0x3c] sm:$0xf]
        %s525 = sshra.s32 %s492, 4
        %s526 = sand.u32 %s492, 15
        %s527 = smul.addr %s525, 8
        %s528 = scalar_lea.vmem [#allocation3], %s527
        %v529 = vld [vmem:[%s528] sm:$0xff]
        %v530 = vld [vmem:[%s528 + $0x8] sm:$0xff]
        %v531 = vld [vmem:[%s528 + $0x10] sm:$0xff]
        %v532 = vld [vmem:[%s528 + $0x18] sm:$0xff]
        %v533 = vld [vmem:[%s528 + $0x20] sm:$0xff]
        %v534 = vld [vmem:[%s528 + $0x28] sm:$0xff]
        %v535 = vld [vmem:[%s528 + $0x30] sm:$0xff]
        %v536 = vld [vmem:[%s528 + $0x38] sm:$0xff]
        %v553 = vunpack.c.l.b16 %v509
        %v554 = vunpack.c.l.b16 %v510
        %v555 = vunpack.c.l.b16 %v511
        %v556 = vunpack.c.l.b16 %v512
        %v557 = vunpack.c.l.b16 %v513
        %v558 = vunpack.c.l.b16 %v514
        %v559 = vunpack.c.l.b16 %v515
        %v560 = vunpack.c.l.b16 %v516
        %v561 = vunpack.c.l.b16 %v517
        %v562 = vunpack.c.l.b16 %v518
        %v563 = vunpack.c.l.b16 %v519
        %v564 = vunpack.c.l.b16 %v520
        %v565 = vunpack.c.l.b16 %v521
        %v566 = vunpack.c.l.b16 %v522
        %v567 = vunpack.c.l.b16 %v523
        %v568 = vunpack.c.l.b16 %v524
        %v569 = vpack.c.b16 %v554, %v553
        %v570 = vpack.c.b16 %v556, %v555
        %v571 = vpack.c.b16 %v558, %v557
        %v572 = vpack.c.b16 %v560, %v559
        %v573 = vpack.c.b16 %v562, %v561
        %v574 = vpack.c.b16 %v564, %v563
        %v575 = vpack.c.b16 %v566, %v565
        %v576 = vpack.c.b16 %v568, %v567
        %585 = vmatprep.subr.bf16.mxu0 0
        %586 = vmatpush1.bf16.msra.mxu0 %v529
        %587 = vmatprep.subr.bf16.mxu0 0
        %588 = vmatpush1.bf16.msra.mxu0 %v530
        %589 = vmatprep.subr.bf16.mxu0 0
        %590 = vmatpush1.bf16.msra.mxu0 %v531
        %591 = vmatprep.subr.bf16.mxu0 0
        %592 = vmatpush1.bf16.msra.mxu0 %v532
        %593 = vmatprep.subr.bf16.mxu0 0
        %594 = vmatpush1.bf16.msra.mxu0 %v533
        %595 = vmatprep.subr.bf16.mxu0 0
        %596 = vmatpush1.bf16.msra.mxu0 %v534
        %597 = vmatprep.subr.bf16.mxu0 0
        %598 = vmatpush1.bf16.msra.mxu0 %v535
        %599 = vmatprep.subr.bf16.mxu0 0
        %600 = vmatpush1.bf16.msra.mxu0 %v536
        %601 = vmatprep.subr.bf16.mxu0 0
        %602 = vmatpush1.bf16.msra.mxu0 0
        %603 = vmatprep.subr.bf16.mxu0 0
        %604 = vmatpush1.bf16.msra.mxu0 0
        %605 = vmatprep.subr.bf16.mxu0 0
        %606 = vmatpush1.bf16.msra.mxu0 0
        %607 = vmatprep.subr.bf16.mxu0 0
        %608 = vmatpush1.bf16.msra.mxu0 0
        %609 = vmatprep.subr.bf16.mxu0 0
        %610 = vmatpush1.bf16.msra.mxu0 0
        %611 = vmatprep.subr.bf16.mxu0 0
        %612 = vmatpush1.bf16.msra.mxu0 0
        %613 = vmatprep.subr.bf16.mxu0 0
        %614 = vmatpush1.bf16.msra.mxu0 0
        %615 = vmatprep.subr.bf16.mxu0 0
        %616 = vmatpush1.bf16.msra.mxu0 0
        %617 = vmatprep.mubr.bf16.mxu0 0
        %618 = vmatmul.mubr.bf16.gmra.mrb[0].mxu0 %v569
        %v619 = vpop.f32.mrb[0].mxu0
        %v620 = vadd.f32 0.0, %v619
        %v621 = vpop.f32.mrb[0].mxu0
        %v622 = vpop.f32.mrb[0].mxu0
        %v623 = vadd.f32 0.0, %v622
        %v624 = vpop.f32.mrb[0].mxu0
        %625 = vmatprep.mubr.bf16.mxu0 0
        %626 = vmatmul.mubr.bf16.gmra.mrb[0].mxu0 %v570
        %v627 = vpop.f32.mrb[0].mxu0
        %v628 = vadd.f32 0.0, %v627
        %v629 = vpop.f32.mrb[0].mxu0
        %v630 = vpop.f32.mrb[0].mxu0
        %v631 = vadd.f32 0.0, %v630
        %v632 = vpop.f32.mrb[0].mxu0
        %633 = vmatprep.mubr.bf16.mxu0 0
        %634 = vmatmul.mubr.bf16.gmra.mrb[0].mxu0 %v571
        %v635 = vpop.f32.mrb[0].mxu0
        %v636 = vadd.f32 0.0, %v635
        %v637 = vpop.f32.mrb[0].mxu0
        %v638 = vpop.f32.mrb[0].mxu0
        %v639 = vadd.f32 0.0, %v638
        %v640 = vpop.f32.mrb[0].mxu0
        %641 = vmatprep.mubr.bf16.mxu0 0
        %642 = vmatmul.mubr.bf16.gmra.mrb[0].mxu0 %v572
        %v643 = vpop.f32.mrb[0].mxu0
        %v644 = vadd.f32 0.0, %v643
        %v645 = vpop.f32.mrb[0].mxu0
        %v646 = vpop.f32.mrb[0].mxu0
        %v647 = vadd.f32 0.0, %v646
        %v648 = vpop.f32.mrb[0].mxu0
        %649 = vmatprep.mubr.bf16.mxu0 0
        %650 = vmatmul.mubr.bf16.gmra.mrb[0].mxu0 %v573
        %v651 = vpop.f32.mrb[0].mxu0
        %v652 = vadd.f32 0.0, %v651
        %v653 = vpop.f32.mrb[0].mxu0
        %v654 = vpop.f32.mrb[0].mxu0
        %v655 = vadd.f32 0.0, %v654
        %v656 = vpop.f32.mrb[0].mxu0
        %657 = vmatprep.mubr.bf16.mxu0 0
        %658 = vmatmul.mubr.bf16.gmra.mrb[0].mxu0 %v574
        %v659 = vpop.f32.mrb[0].mxu0
        %v660 = vadd.f32 0.0, %v659
        %v661 = vpop.f32.mrb[0].mxu0
        %v662 = vpop.f32.mrb[0].mxu0
        %v663 = vadd.f32 0.0, %v662
        %v664 = vpop.f32.mrb[0].mxu0
        %665 = vmatprep.mubr.bf16.mxu0 0
        %666 = vmatmul.mubr.bf16.gmra.mrb[0].mxu0 %v575
        %v667 = vpop.f32.mrb[0].mxu0
        %v668 = vadd.f32 0.0, %v667
        %v669 = vpop.f32.mrb[0].mxu0
        %v670 = vpop.f32.mrb[0].mxu0
        %v671 = vadd.f32 0.0, %v670
        %v672 = vpop.f32.mrb[0].mxu0
        %673 = vmatprep.mubr.bf16.mxu0 0
        %674 = vmatmul.mubr.bf16.gmra.mrb[0].mxu0 %v576
        %v675 = vpop.f32.mrb[0].mxu0
        %v676 = vadd.f32 0.0, %v675
        %v677 = vpop.f32.mrb[0].mxu0
        %v678 = vpop.f32.mrb[0].mxu0
        %v679 = vadd.f32 0.0, %v678
        %v680 = vpop.f32.mrb[0].mxu0
        %681 = vdwg.mxu0
        %v682 = vadd.f32 %v493, %v620
        %v683 = vadd.f32 %v494, %v623
        %v684 = vadd.f32 %v495, %v628
        %v685 = vadd.f32 %v496, %v631
        %v686 = vadd.f32 %v497, %v636
        %v687 = vadd.f32 %v498, %v639
        %v688 = vadd.f32 %v499, %v644
        %v689 = vadd.f32 %v500, %v647
        %v690 = vadd.f32 %v501, %v652
        %v691 = vadd.f32 %v502, %v655
        %v692 = vadd.f32 %v503, %v660
        %v693 = vadd.f32 %v504, %v663
        %v694 = vadd.f32 %v505, %v668
        %v695 = vadd.f32 %v506, %v671
        %v696 = vadd.f32 %v507, %v676
        %v697 = vadd.f32 %v508, %v679
        %698 = vst [vmem:[#allocation4] sm:$0xff] %v682
        %699 = vst [vmem:[#allocation4 + $0x8] sm:$0xff] %v683
        %700 = vst [vmem:[#allocation4 + $0x10] sm:$0xff] %v684
        %701 = vst [vmem:[#allocation4 + $0x18] sm:$0xff] %v685
        %702 = vst [vmem:[#allocation4 + $0x20] sm:$0xff] %v686
        %703 = vst [vmem:[#allocation4 + $0x28] sm:$0xff] %v687
        %704 = vst [vmem:[#allocation4 + $0x30] sm:$0xff] %v688
        %705 = vst [vmem:[#allocation4 + $0x38] sm:$0xff] %v689
        %706 = vst [vmem:[#allocation4 + $0x40] sm:$0xff] %v690
        %707 = vst [vmem:[#allocation4 + $0x48] sm:$0xff] %v691
        %708 = vst [vmem:[#allocation4 + $0x50] sm:$0xff] %v692
        %709 = vst [vmem:[#allocation4 + $0x58] sm:$0xff] %v693
        %710 = vst [vmem:[#allocation4 + $0x60] sm:$0xff] %v694
        %711 = vst [vmem:[#allocation4 + $0x68] sm:$0xff] %v695
        %712 = vst [vmem:[#allocation4 + $0x70] sm:$0xff] %v696
        %713 = vst [vmem:[#allocation4 + $0x78] sm:$0xff] %v697
        // Predicated region
        $region57: #{tpu_custom_call.1} parent=31 // pred_check
          %p714 = pneg %p261
        $region58: #{tpu_custom_call.1} parent=31 // pred_check_branch
          %716 = sbr.rel (%p714) target = $region60
        $region59: #{tpu_custom_call.1} parent=31 // pred_region
          %v717 = vld [vmem:[#allocation4] sm:$0xff]
          %v718 = vld [vmem:[#allocation4 + $0x8] sm:$0xff]
          %v719 = vld [vmem:[#allocation4 + $0x10] sm:$0xff]
          %v720 = vld [vmem:[#allocation4 + $0x18] sm:$0xff]
          %v721 = vld [vmem:[#allocation4 + $0x20] sm:$0xff]
          %v722 = vld [vmem:[#allocation4 + $0x28] sm:$0xff]
          %v723 = vld [vmem:[#allocation4 + $0x30] sm:$0xff]
          %v724 = vld [vmem:[#allocation4 + $0x38] sm:$0xff]
          %v725 = vld [vmem:[#allocation4 + $0x40] sm:$0xff]
          %v726 = vld [vmem:[#allocation4 + $0x48] sm:$0xff]
          %v727 = vld [vmem:[#allocation4 + $0x50] sm:$0xff]
          %v728 = vld [vmem:[#allocation4 + $0x58] sm:$0xff]
          %v729 = vld [vmem:[#allocation4 + $0x60] sm:$0xff]
          %v730 = vld [vmem:[#allocation4 + $0x68] sm:$0xff]
          %v731 = vld [vmem:[#allocation4 + $0x70] sm:$0xff]
          %v732 = vld [vmem:[#allocation4 + $0x78] sm:$0xff]
          %v733 = vld [vmem:[%s254] sm:$0x1]
          %v735 = vlaneseq
          %v736 = vshrl.u32 %v735, 7
          %v737 = vsub.s32 0, %v736
          %v738 = vrot.slane %v733, %v737
          %v740 = vadd.f32 %v717, %v738
          %v741 = vadd.f32 %v718, %v738
          %v742 = vadd.f32 %v719, %v738
          %v743 = vadd.f32 %v720, %v738
          %v744 = vadd.f32 %v721, %v738
          %v745 = vadd.f32 %v722, %v738
          %v746 = vadd.f32 %v723, %v738
          %v747 = vadd.f32 %v724, %v738
          %v748 = vadd.f32 %v725, %v738
          %v749 = vadd.f32 %v726, %v738
          %v750 = vadd.f32 %v727, %v738
          %v751 = vadd.f32 %v728, %v738
          %v752 = vadd.f32 %v729, %v738
          %v753 = vadd.f32 %v730, %v738
          %v754 = vadd.f32 %v731, %v738
          %v755 = vadd.f32 %v732, %v738
          %v756 = vmax.f32 %v740, 0.0
          %v757 = vmax.f32 %v741, 0.0
          %v758 = vmax.f32 %v742, 0.0
          %v759 = vmax.f32 %v743, 0.0
          %v760 = vmax.f32 %v744, 0.0
          %v761 = vmax.f32 %v745, 0.0
          %v762 = vmax.f32 %v746, 0.0
          %v763 = vmax.f32 %v747, 0.0
          %v764 = vmax.f32 %v748, 0.0
          %v765 = vmax.f32 %v749, 0.0
          %v766 = vmax.f32 %v750, 0.0
          %v767 = vmax.f32 %v751, 0.0
          %v768 = vmax.f32 %v752, 0.0
          %v769 = vmax.f32 %v753, 0.0
          %v770 = vmax.f32 %v754, 0.0
          %v771 = vmax.f32 %v755, 0.0
          %s772 = smul.u32 %s26, 128
          %v773 = vpack.c.bf16 %v757, %v756
          %v774 = vpack.c.bf16 %v759, %v758
          %v775 = vpack.c.bf16 %v761, %v760
          %v776 = vpack.c.bf16 %v763, %v762
          %v777 = vpack.c.bf16 %v765, %v764
          %v778 = vpack.c.bf16 %v767, %v766
          %v779 = vpack.c.bf16 %v769, %v768
          %v780 = vpack.c.bf16 %v771, %v770
          %s781 = sshra.s32 %s772, 4
          %s782 = sand.u32 %s772, 15
          %s783 = smul.addr %s781, 8
          %s784 = scalar_lea.vmem [#allocation2], %s783
          %785 = vst [vmem:[%s784] sm:$0xff] %v773
          %786 = vst [vmem:[%s784 + $0x8] sm:$0xff] %v774
          %787 = vst [vmem:[%s784 + $0x10] sm:$0xff] %v775
          %788 = vst [vmem:[%s784 + $0x18] sm:$0xff] %v776
          %789 = vst [vmem:[%s784 + $0x20] sm:$0xff] %v777
          %790 = vst [vmem:[%s784 + $0x28] sm:$0xff] %v778
          %791 = vst [vmem:[%s784 + $0x30] sm:$0xff] %v779
          %792 = vst [vmem:[%s784 + $0x38] sm:$0xff] %v780
          %p793 = scmp.eq.s32.totalorder %s25, 1
          // Predicated region
          $region61: #{tpu_custom_call.1} parent=59 // pred_check
            %p794 = pneg %p793
          $region62: #{tpu_custom_call.1} parent=59 // pred_check_branch
            %796 = sbr.rel (%p794) target = $region64
          $region63: #{tpu_custom_call.1} parent=59 // pred_region
            %797 = vst [vmem:[#allocation11] sm:$0xff] %v756
            %798 = vst [vmem:[#allocation11 + $0x8] sm:$0xff] %v757
            %799 = vst [vmem:[#allocation11 + $0x10] sm:$0xff] %v758
            %800 = vst [vmem:[#allocation11 + $0x18] sm:$0xff] %v759
            %801 = vst [vmem:[#allocation11 + $0x20] sm:$0xff] %v760
            %802 = vst [vmem:[#allocation11 + $0x28] sm:$0xff] %v761
            %803 = vst [vmem:[#allocation11 + $0x30] sm:$0xff] %v762
            %804 = vst [vmem:[#allocation11 + $0x38] sm:$0xff] %v763
            %805 = vst [vmem:[#allocation11 + $0x40] sm:$0xff] %v764
            %806 = vst [vmem:[#allocation11 + $0x48] sm:$0xff] %v765
            %807 = vst [vmem:[#allocation11 + $0x50] sm:$0xff] %v766
            %808 = vst [vmem:[#allocation11 + $0x58] sm:$0xff] %v767
            %809 = vst [vmem:[#allocation11 + $0x60] sm:$0xff] %v768
            %810 = vst [vmem:[#allocation11 + $0x68] sm:$0xff] %v769
            %811 = vst [vmem:[#allocation11 + $0x70] sm:$0xff] %v770
            %812 = vst [vmem:[#allocation11 + $0x78] sm:$0xff] %v771
          $region64: #{tpu_custom_call.1} parent=59 // pred_fallthru
            _
        $region60: #{tpu_custom_call.1} parent=31 // pred_fallthru
          _
        // Predicated region
        $region65: #{tpu_custom_call.1} parent=31 // pred_check
          %p813 = pneg %p143
        $region66: #{tpu_custom_call.1} parent=31 // pred_check_branch
          %815 = sbr.rel (%p813) target = $region68
        $region67: #{tpu_custom_call.1} parent=31 // pred_region
          %s816 = smul.u32 16, %s26
          %s818 = ssub.s32 2048, 2048
          %819 = vsyncadd [#allocation8], %s818
          %s820 = smul.addr %s816, 128
          %s821 = scalar_lea.hbm %s4, %s820
          %s822 = sshll.u32 [#allocation11], 4
          %s823 = int_to_ptr.vmem [resolvable:$true] %s822
          %828 = dma.vmem_to_hbm [thread:$0]  %s823, 2048, %s821, [#allocation8], 128, 128, 8
        $region68: #{tpu_custom_call.1} parent=31 // pred_fallthru
          _
        // Predicated region
        $region69: #{tpu_custom_call.1} parent=31 // pred_check
          %p829 = pneg %p143
        $region70: #{tpu_custom_call.1} parent=31 // pred_check_branch
          %831 = sbr.rel (%p829) target = $region72
        $region71: #{tpu_custom_call.1} parent=31 // pred_region
          %832 = dma.done [#allocation8], 2048
        $region72: #{tpu_custom_call.1} parent=31 // pred_fallthru
          _
      $region32: #{tpu_custom_call.1} parent=5 // pred_fallthru
        _
      %p833 = scmp.le.s32.totalorder 2, %s15
      // Predicated region
      $region73: #{tpu_custom_call.1} parent=5 // pred_check
        %p834 = pneg %p833
      $region74: #{tpu_custom_call.1} parent=5 // pred_check_branch
        %836 = sbr.rel (%p834) target = $region76
      $region75: #{tpu_custom_call.1} parent=5 // pred_region
        %s837 = ssub.s32 %s15, 2
      $region76: #{tpu_custom_call.1} parent=5 // pred_fallthru
        _
    $region6: #{tpu_custom_call.1} parent=1 // loop_footer
      %s19 = sadd.s32 1, %s15
    $region7: #{tpu_custom_call.1} parent=1 // loop_footer_branch
      %14 = sbr.rel target = $region3
    $region8: #{tpu_custom_call.1} parent=1 // loop_exit
      _
    %838 = vsyncpa [#allocation7], 1
    %s839 = scalar_lea.sflag [#allocation7], 1
    %840 = vsyncpa %s839, 1
    %841 = vsyncpa [#allocation10], 1
    %s842 = scalar_lea.sflag [#allocation10], 1
    %843 = vsyncpa %s842, 1
    %844 = vsyncpa [#allocation8], 1
    %s845 = scalar_lea.sflag [#allocation8], 1
    %846 = vsyncpa %s845, 1
  %847 = vsyncmov [#allocation5]
  %s848 = vpop.sfrf %847
  %p849 = scmp.eq.s32.totalorder %s848, 0
  %p850 = pneg %p849
  %852 = shalt.err (%p850)

</llo_original>
